<compile_context>
chip_gen: v6e
topology: v6e:2x2x1
jax: 0.10.0
libtpu: 0.0.40
codegen_flags: <defaults>
</compile_context>

<pallas_src>
import jax
import jax.numpy as jnp
from jax.experimental import pallas as pl
from jax.experimental.pallas import tpu as pltpu

LN_EPS = 1e-6


# ----------------------------- kernels ---------------------------------------


def _modulation_kernel(emb_ref, w_ref, b_ref, out_ref):
    # emb_ref: (B, dim) resident; w_ref: (dim, TILE_N) streamed; b_ref: (1, TILE_N)
    e = emb_ref[...].astype(jnp.float32)
    h = e * jax.nn.sigmoid(e)                       # SiLU kept in f32 (v5e: no bf16 VPU/EUP)
    acc = jnp.dot(h.astype(w_ref.dtype), w_ref[...],
                  preferred_element_type=jnp.float32)
    acc = acc + b_ref[...].astype(jnp.float32)
    out_ref[...] = acc.astype(out_ref.dtype)


def _norm_modulate_kernel(x_ref, shift_ref, scale_ref, out_ref):
    # x_ref: (1, TILE_S, dim); shift/scale: (1, 1, dim)
    x = x_ref[...].astype(jnp.float32)
    mean = jnp.mean(x, axis=-1, keepdims=True)
    xc = x - mean
    var = jnp.mean(xc * xc, axis=-1, keepdims=True)
    xn = xc * jax.lax.rsqrt(var + LN_EPS)           # LayerNorm, elementwise_affine=False
    scale = scale_ref[...].astype(jnp.float32)
    shift = shift_ref[...].astype(jnp.float32)
    out_ref[...] = (xn * (1.0 + scale) + shift).astype(out_ref.dtype)


# ----------------------------- wrapper ----------------------------------------


def _pick_tile(full, candidates):
    for c in candidates:
        if c <= full and full % c == 0:
            return c
    return full  # fall back to full extent (always a legal block shape)


def ada_layer_norm_zero(x, emb, w, b, *, weight_dtype=None):
    """AdaLayerNormZero forward.

    x:   (B, S, dim)
    emb: (B, dim)
    w:   (dim, 6*dim)  -- nn.Linear weight already transposed, so y = silu(emb) @ w + b
    b:   (6*dim,)
    weight_dtype: optionally stream the weight as e.g. jnp.bfloat16 (f32 accumulation).
    """
    B, S, dim = x.shape
    N = 6 * dim
    assert emb.shape == (B, dim) and w.shape == (dim, N) and b.shape == (N,)

    if weight_dtype is not None:
        w = w.astype(weight_dtype)                  # cast once at the wrapper, not in-loop
    wbytes = w.dtype.itemsize
    b2 = b.reshape(1, N)

    # --- Kernel 1: modulation = Linear(SiLU(emb)), tiled over the 6*dim columns ---
    # TILE_N: multiple of 128 that divides N and keeps the double-buffered W tile <= ~24 MiB.
    tile_candidates = tuple(t for t in (512, 256, 128)
                            if 2 * dim * t * wbytes <= 24 * 1024 * 1024)
    TILE_N = _pick_tile(N, tile_candidates)
    grid_n = N // TILE_N

    mod_cost = pl.CostEstimate(
        flops=2 * B * dim * N,
        transcendentals=B * dim * grid_n,           # sigmoid recomputed per tile (tiny)
        bytes_accessed=dim * N * wbytes + N * 4 + B * dim * 4 + B * N * 4,
    )

    mod = pl.pallas_call(
        _modulation_kernel,
        out_shape=jax.ShapeDtypeStruct((B, N), emb.dtype),
        grid_spec=pltpu.PrefetchScalarGridSpec(
            num_scalar_prefetch=0,
            grid=(grid_n,),
            in_specs=[
                pl.BlockSpec((B, dim), lambda j: (0, 0)),        # emb: small, resident
                pl.BlockSpec((dim, TILE_N), lambda j: (0, j)),   # W: streamed, double-buffered
                pl.BlockSpec((1, TILE_N), lambda j: (0, j)),     # bias tile
            ],
            out_specs=pl.BlockSpec((B, TILE_N), lambda j: (0, j)),
        ),
        compiler_params=pltpu.CompilerParams(
            dimension_semantics=("parallel",),       # independent column tiles (v7x: 2 TCs)
            vmem_limit_bytes=64 * 1024 * 1024,
        ),
        cost_estimate=mod_cost,
    )(emb, w, b2)

    # torch.chunk(emb, 6, dim=1) ordering
    shift_msa = mod[:, 0 * dim:1 * dim]
    scale_msa = mod[:, 1 * dim:2 * dim]
    gate_msa  = mod[:, 2 * dim:3 * dim]
    shift_mlp = mod[:, 3 * dim:4 * dim]
    scale_mlp = mod[:, 4 * dim:5 * dim]
    gate_mlp  = mod[:, 5 * dim:6 * dim]

    # --- Kernel 2: LayerNorm(x) * (1 + scale_msa) + shift_msa, tiled over (B, S) ---
    TILE_S = _pick_tile(S, (256, 128, 64, 32, 16, 8))
    grid_s = S // TILE_S

    shift3 = shift_msa.reshape(B, 1, dim)
    scale3 = scale_msa.reshape(B, 1, dim)

    norm_cost = pl.CostEstimate(
        flops=10 * B * S * dim,
        transcendentals=B * S,                       # rsqrt per row
        bytes_accessed=2 * B * S * dim * x.dtype.itemsize + 2 * B * dim * 4,
    )

    x_out = pl.pallas_call(
        _norm_modulate_kernel,
        out_shape=jax.ShapeDtypeStruct((B, S, dim), x.dtype),
        grid_spec=pltpu.PrefetchScalarGridSpec(
            num_scalar_prefetch=0,
            grid=(B, grid_s),
            in_specs=[
                pl.BlockSpec((1, TILE_S, dim), lambda bi, si: (bi, si, 0)),
                pl.BlockSpec((1, 1, dim), lambda bi, si: (bi, 0, 0)),
                pl.BlockSpec((1, 1, dim), lambda bi, si: (bi, 0, 0)),
            ],
            out_specs=pl.BlockSpec((1, TILE_S, dim), lambda bi, si: (bi, si, 0)),
        ),
        compiler_params=pltpu.CompilerParams(
            dimension_semantics=("parallel", "parallel"),
        ),
        cost_estimate=norm_cost,
    )(x, shift3, scale3)

    return x_out, gate_msa, shift_mlp, scale_mlp, gate_mlp


# ----------------------------- reference & demo --------------------------------


def _reference(x, emb, w, b):
    h = emb * jax.nn.sigmoid(emb)
    mod = h @ w + b
    (shift_msa, scale_msa, gate_msa,
     shift_mlp, scale_mlp, gate_mlp) = jnp.split(mod, 6, axis=-1)
    mean = jnp.mean(x, axis=-1, keepdims=True)
    var = jnp.mean((x - mean) ** 2, axis=-1, keepdims=True)
    xn = (x - mean) / jnp.sqrt(var + LN_EPS)
    x_out = xn * (1.0 + scale_msa[:, None, :]) + shift_msa[:, None, :]
    return x_out, gate_msa, shift_mlp, scale_mlp, gate_mlp


if __name__ == "__main__":
    B, S, DIM = 2, 8, 32

    key = jax.random.PRNGKey(0)
    kx, ke, kw, kb = jax.random.split(key, 4)
    x = jax.random.normal(kx, (B, S, DIM), dtype=jnp.float32)
    emb = jax.random.normal(ke, (B, DIM), dtype=jnp.float32)
    w = 0.05 * jax.random.normal(kw, (DIM, 6 * DIM), dtype=jnp.float32)
    b = 0.05 * jax.random.normal(kb, (6 * DIM,), dtype=jnp.float32)

    outs = ada_layer_norm_zero(x, emb, w, b)
    outs = jax.block_until_ready(outs)

    refs = _reference(x, emb, w, b)
    names = ("x", "gate_msa", "shift_mlp", "scale_mlp", "gate_mlp")
    for name, o, r in zip(names, outs, refs):
        assert o.shape == r.shape and o.dtype == jnp.float32, f"bad shape/dtype for {name}"
        assert jnp.allclose(o, r, atol=1e-5, rtol=1e-5), f"mismatch vs reference in {name}"

    print("KERNEL_OK")
</pallas_src>

<mosaic_0001>
module attributes {stable_mosaic.version = 11 : i64} {
  func.func @_modulation_kernel(%arg0: i32, %arg1: memref<2x32xf32, #tpu.memory_space<vmem>>, %arg2: memref<32x192xf32, #tpu.memory_space<vmem>>, %arg3: memref<1x192xf32, #tpu.memory_space<vmem>>, %arg4: memref<2x192xf32, #tpu.memory_space<vmem>>) attributes {dimension_semantics = [#tpu.dimension_semantics<parallel>], iteration_bounds = array<i64: 1>, scalar_prefetch = 0 : i64, scratch_operands = 0 : i64, tpu.core_type = #tpu.core_type<tc>, window_params = [{pipeline_mode = #tpu.pipeline_mode<synchronous>, transform_indices = @transform_0, window_bounds = array<i64: 2, 32>}, {transform_indices = @transform_1, window_bounds = array<i64: 32, 192>}, {transform_indices = @transform_2, window_bounds = array<i64: 1, 192>}, {transform_indices = @transform_3, window_bounds = array<i64: 2, 192>}]} {
    %c0 = arith.constant 0 : index
    %c0_0 = arith.constant 0 : index
    %0 = vector.load %arg1[%c0, %c0_0] : memref<2x32xf32, #tpu.memory_space<vmem>>, vector<2x32xf32>
    %1 = arith.negf %0 : vector<2x32xf32>
    %2 = math.exp %1 : vector<2x32xf32>
    %cst = arith.constant 1.000000e+00 : f32
    %3 = vector.broadcast %cst : f32 to vector<2x32xf32>
    %4 = arith.addf %3, %2 : vector<2x32xf32>
    %5 = arith.divf %3, %4 : vector<2x32xf32>
    %6 = arith.mulf %0, %5 : vector<2x32xf32>
    %c0_1 = arith.constant 0 : index
    %c0_2 = arith.constant 0 : index
    %7 = vector.load %arg2[%c0_1, %c0_2] : memref<32x192xf32, #tpu.memory_space<vmem>>, vector<32x192xf32>
    %cst_3 = arith.constant dense<0.000000e+00> : vector<2x192xf32>
    %8 = tpu.matmul %6, %7, %cst_3 {dimension_numbers = #tpu.dot_dimension_numbers<[1], [0], [0], [1], [0, 0, 1, 1], [], []>} : vector<2x32xf32>, vector<32x192xf32>, vector<2x192xf32> -> vector<2x192xf32>
    %c0_4 = arith.constant 0 : index
    %c0_5 = arith.constant 0 : index
    %9 = vector.load %arg3[%c0_4, %c0_5] : memref<1x192xf32, #tpu.memory_space<vmem>>, vector<1x192xf32>
    %10 = vector.broadcast %9 : vector<1x192xf32> to vector<2x192xf32>
    %11 = arith.addf %8, %10 : vector<2x192xf32>
    %c0_6 = arith.constant 0 : index
    %c0_7 = arith.constant 0 : index
    %12 = vector.load %arg4[%c0_6, %c0_7] : memref<2x192xf32, #tpu.memory_space<vmem>>, vector<2x192xf32>
    tpu.vector_store %arg4[%c0_6, %c0_7], %11 {strides = array<i32>} : memref<2x192xf32, #tpu.memory_space<vmem>>, vector<2x192xf32>,
    return
  }
  func.func @transform_0(%arg0: i32) -> (i32, i32) {
    %c0_i32 = arith.constant 0 : i32
    %c0_i32_0 = arith.constant 0 : i32
    %c0_i32_1 = arith.constant 0 : i32
    return %c0_i32, %c0_i32_0 : i32, i32
  }
  func.func @transform_1(%arg0: i32) -> (i32, i32) {
    %c0_i32 = arith.constant 0 : i32
    %c0_i32_0 = arith.constant 0 : i32
    return %c0_i32, %arg0 : i32, i32
  }
  func.func @transform_2(%arg0: i32) -> (i32, i32) {
    %c0_i32 = arith.constant 0 : i32
    %c0_i32_0 = arith.constant 0 : i32
    return %c0_i32, %arg0 : i32, i32
  }
  func.func @transform_3(%arg0: i32) -> (i32, i32) {
    %c0_i32 = arith.constant 0 : i32
    %c0_i32_0 = arith.constant 0 : i32
    return %c0_i32, %arg0 : i32, i32
  }
}

</mosaic_0001>

<llo_original>
// kernel: tpu_custom_call.1
$region0: #{tpu_custom_call.1}
  #allocation0 [shape = 'u32[]', space=smem, size = 0x4, offset = 0x4, fixed_abs, tag = 'smem constant byte address 0x4 - core index']
  #allocation1 [shape = 'u32[144,128]{1,0:T(1,128)}', space=vmem, size = 0x12000, scoped, tag = 'internal scratch']
  %s0 = inlined_call_operand.hbm [shape: f32[2,32], index: 0, kind: input, shape index: {}]
  %s1 = inlined_call_operand.hbm [shape: f32[32,192], index: 1, kind: input, shape index: {}]
  %s2 = inlined_call_operand.vmem [shape: f32[1,192], index: 2, kind: input, shape index: {}]
  %s3 = inlined_call_operand.hbm [shape: f32[2,192], index: 3, kind: output, shape index: {}]
  %s4 = sld [smem:[#allocation0]]
  $region30: #{tpu_custom_call.1} parent=0
    _
  %s6 = ssub.s32 1, %s4
  %s7 = scalar_select 0, %s6, %s4
  $region1: #{tpu_custom_call.1} parent=0
    #allocation2 [shape = 'u8[1024]{0}', space=vmem, size = 0x400, scoped, tag = 'input window, operand 0, single buffered']
    #allocation3 [shape = 's32[1]{0}', space=sflag, size = 0x4, scoped, tag = 'scoped memory for tpu_custom_call.1']
    #allocation4 [shape = 's32[1]{0}', space=sflag, size = 0x4, scoped, tag = 'scoped memory for tpu_custom_call.1']
    #allocation5 [shape = 'u8[32768]{0}', space=vmem, size = 0x8000, scoped, tag = 'input window, operand 1, single buffered']
    #allocation6 [shape = 's32[1]{0}', space=sflag, size = 0x4, scoped, tag = 'scoped memory for tpu_custom_call.1']
    #allocation7 [shape = 'u8[2048]{0}', space=vmem, size = 0x800, scoped, tag = 'output window, operand 0, single buffered']
    %8 = vsyncpa [#allocation3], 0
    %9 = vsyncpa [#allocation6], 0
    %10 = vsyncpa [#allocation4], 0
    // Predicated region
    $region2: #{tpu_custom_call.1} parent=1 // pred_check
      _
    $region3: #{tpu_custom_call.1} parent=1 // pred_check_branch
      %12 = sbr.rel (0) target = $region5
    $region4: #{tpu_custom_call.1} parent=1 // pred_region
      %s14 = ssub.s32 32, 32
      %15 = vsyncadd [#allocation3], %s14
      %s17 = sshll.u32 [#allocation2], 4
      %s18 = int_to_ptr.vmem [resolvable:$true] %s17
      %20 = dma.hbm_to_vmem [thread:$0]  %s0, 32, %s18, [#allocation3]
    $region5: #{tpu_custom_call.1} parent=1 // pred_fallthru
      _
    // Predicated region
    $region6: #{tpu_custom_call.1} parent=1 // pred_check
      _
    $region7: #{tpu_custom_call.1} parent=1 // pred_check_branch
      %22 = sbr.rel (0) target = $region9
    $region8: #{tpu_custom_call.1} parent=1 // pred_region
      %s24 = ssub.s32 1024, 1024
      %25 = vsyncadd [#allocation6], %s24
      %s26 = sshll.u32 [#allocation5], 4
      %s27 = int_to_ptr.vmem [resolvable:$true] %s26
      %32 = dma.hbm_to_vmem [thread:$0]  %s1, 1024, %s27, [#allocation6], 256, 256, 16
    $region9: #{tpu_custom_call.1} parent=1 // pred_fallthru
      _
    // Predicated region
    $region10: #{tpu_custom_call.1} parent=1 // pred_check
      _
    $region11: #{tpu_custom_call.1} parent=1 // pred_check_branch
      %34 = sbr.rel (0) target = $region13
    $region12: #{tpu_custom_call.1} parent=1 // pred_region
      _
    $region13: #{tpu_custom_call.1} parent=1 // pred_fallthru
      _
    // Predicated region
    $region14: #{tpu_custom_call.1} parent=1 // pred_check
      _
    $region15: #{tpu_custom_call.1} parent=1 // pred_check_branch
      %36 = sbr.rel (0) target = $region17
    $region16: #{tpu_custom_call.1} parent=1 // pred_region
      %37 = dma.done [#allocation3], 32
    $region17: #{tpu_custom_call.1} parent=1 // pred_fallthru
      _
    // Predicated region
    $region18: #{tpu_custom_call.1} parent=1 // pred_check
      _
    $region19: #{tpu_custom_call.1} parent=1 // pred_check_branch
      %39 = sbr.rel (0) target = $region21
    $region20: #{tpu_custom_call.1} parent=1 // pred_region
      %40 = dma.done [#allocation6], 1024
    $region21: #{tpu_custom_call.1} parent=1 // pred_fallthru
      _
    %v41 = vld [vmem:[#allocation2] sm:$0x3]
    %v42 = vxor.u32 %v41, 2147483648
    %v43 = vmul.f32 %v42, 1.442695
    %v44 = vpow.pop %v43
    %v45 = vadd.f32 %v44, 1.0
    %v46 = vrcp.pop %v45
    %v47 = vmul.f32 1.0, %v46
    %v48 = vmul.f32 %v41, %v47
    %v49 = vld [vmem:[#allocation5] sm:$0xff]
    %v50 = vld [vmem:[#allocation5 + $0x8] sm:$0xff]
    %v51 = vld [vmem:[#allocation5 + $0x10] sm:$0xff]
    %v52 = vld [vmem:[#allocation5 + $0x18] sm:$0xff]
    %v53 = vld [vmem:[#allocation5 + $0x20] sm:$0xff]
    %v54 = vld [vmem:[#allocation5 + $0x28] sm:$0xff]
    %v55 = vld [vmem:[#allocation5 + $0x30] sm:$0xff]
    %v56 = vld [vmem:[#allocation5 + $0x38] sm:$0xff]
    %v57 = vld [vmem:[%s2] sm:$0x3]
    %v59 = vlaneseq
    %v60 = vshrl.u32 %v59, 7
    %v61 = vsub.s32 0, %v60
    %v62 = vrot.slane %v57, %v61
    %v63 = vlaneseq
    %v64 = vshrl.u32 %v63, 7
    %v65 = vsub.s32 1, %v64
    %v66 = vrot.slane %v57, %v65
    %vm69 = vcmask 261120
    %v71 = vsel %vm69, %v48, 0
    %73 = vmatprep.subr.mxu0 0.0
    %74 = vmatpush1.msra.mxu0 0.0
    %75 = vmatprep.subr.mxu0 0.0
    %76 = vmatpush1.msra.mxu0 0.0
    %77 = vmatprep.subr.mxu0 0.0
    %78 = vmatpush1.msra.mxu0 0.0
    %79 = vmatprep.subr.mxu0 0.0
    %80 = vmatpush1.msra.mxu0 0.0
    %81 = vmatprep.subr.mxu0 0.0
    %82 = vmatpush1.msra.mxu0 0.0
    %83 = vmatprep.subr.mxu0 0.0
    %84 = vmatpush1.msra.mxu0 0.0
    %85 = vmatprep.subr.mxu0 0.0
    %86 = vmatpush1.msra.mxu0 0.0
    %87 = vmatprep.subr.mxu0 0.0
    %88 = vmatpush1.msra.mxu0 0.0
    %89 = vmatprep.subr.mxu0 0.0
    %90 = vmatpush1.msra.mxu0 0.0
    %91 = vmatprep.subr.mxu0 0.0
    %92 = vmatpush1.msra.mxu0 0.0
    %93 = vmatprep.subr.mxu0 0.0
    %94 = vmatpush1.msra.mxu0 0.0
    %95 = vmatprep.subr.mxu0 0.0
    %96 = vmatpush1.msra.mxu0 0.0
    %97 = vmatprep.subr.mxu0 %v56
    %98 = vmatpush1.msra.mxu0 %v55
    %99 = vmatprep.subr.mxu0 %v54
    %100 = vmatpush1.msra.mxu0 %v53
    %101 = vmatprep.subr.mxu0 %v52
    %102 = vmatpush1.msra.mxu0 %v51
    %103 = vmatprep.subr.mxu0 %v50
    %104 = vmatpush1.msra.mxu0 %v49
    %105 = vmatprep.subr.mxu0 0.0
    %106 = vmatpush2.msra.mxu0 0.0
    %107 = vmatprep.subr.mxu0 0.0
    %108 = vmatpush2.msra.mxu0 0.0
    %109 = vmatprep.subr.mxu0 0.0
    %110 = vmatpush2.msra.mxu0 0.0
    %111 = vmatprep.subr.mxu0 0.0
    %112 = vmatpush2.msra.mxu0 0.0
    %113 = vmatprep.subr.mxu0 0.0
    %114 = vmatpush2.msra.mxu0 0.0
    %115 = vmatprep.subr.mxu0 0.0
    %116 = vmatpush2.msra.mxu0 0.0
    %117 = vmatprep.subr.mxu0 0.0
    %118 = vmatpush2.msra.mxu0 0.0
    %119 = vmatprep.subr.mxu0 0.0
    %120 = vmatpush2.msra.mxu0 0.0
    %121 = vmatprep.subr.mxu0 0.0
    %122 = vmatpush2.msra.mxu0 0.0
    %123 = vmatprep.subr.mxu0 0.0
    %124 = vmatpush2.msra.mxu0 0.0
    %125 = vmatprep.subr.mxu0 0.0
    %126 = vmatpush2.msra.mxu0 0.0
    %127 = vmatprep.subr.mxu0 0.0
    %128 = vmatpush2.msra.mxu0 0.0
    %129 = vmatprep.subr.mxu0 0.0
    %130 = vmatpush2.msra.mxu0 0.0
    %131 = vmatprep.subr.mxu0 0.0
    %132 = vmatpush2.msra.mxu0 0.0
    %133 = vmatprep.subr.mxu0 0.0
    %134 = vmatpush2.msra.mxu0 0.0
    %135 = vmatprep.subr.mxu0 0.0
    %136 = vmatpush2.msra.mxu0 0.0
    %137 = vmatprep.mubr.f32.mxu0 0.0
    %138 = vmatmul.mubr.f32.gmra.mxu0 %v71
    %v139 = vpop.f32.mrf.mxu0
    %v140 = vadd.f32 %v62, %v139
    %v141 = vpop.f32.mrf.mxu0
    %v142 = vadd.f32 %v66, %v141
    %143 = vdwg.mxu0
    %v146 = vcombine.low %v140, %v142
    %v148 = vunpack.c.l.s4 1983009808
    %v149 = vunpack.c.0.s8 %v148
    %v150 = vlaneseq
    %v151 = vshrl.u32 %v150, 7
    %v152 = vsub.s32 %v149, %v151
    %v153 = vrot.slane %v146, %v152
    %vm155 = vcmask 1041408
    %vm156 = vcmask 519170
    %vm157 = vmor %vm156, %vm155
    %158 = vst.msk [vmem:[#allocation7] sm:$0xf] %vm157, %v153
    // Predicated region
    $region22: #{tpu_custom_call.1} parent=1 // pred_check
      _
    $region23: #{tpu_custom_call.1} parent=1 // pred_check_branch
      %160 = sbr.rel (0) target = $region25
    $region24: #{tpu_custom_call.1} parent=1 // pred_region
      %s162 = ssub.s32 64, 64
      %163 = vsyncadd [#allocation4], %s162
      %s165 = sshll.u32 [#allocation7], 4
      %s166 = int_to_ptr.vmem [resolvable:$true] %s165
      %168 = dma.vmem_to_hbm [thread:$0]  %s166, 64, %s3, [#allocation4]
    $region25: #{tpu_custom_call.1} parent=1 // pred_fallthru
      _
    // Predicated region
    $region26: #{tpu_custom_call.1} parent=1 // pred_check
      _
    $region27: #{tpu_custom_call.1} parent=1 // pred_check_branch
      %170 = sbr.rel (0) target = $region29
    $region28: #{tpu_custom_call.1} parent=1 // pred_region
      %171 = dma.done [#allocation4], 64
    $region29: #{tpu_custom_call.1} parent=1 // pred_fallthru
      _
    %172 = vsyncpa [#allocation3], 1
    %173 = vsyncpa [#allocation6], 1
    %174 = vsyncpa [#allocation4], 1

</llo_original>
